<compile_context>
chip_gen: v7x
topology: tpu7x:2x2x1
jax: 0.10.0
libtpu: 0.0.40
codegen_flags: <defaults>
</compile_context>

<pallas_src>
import functools

import jax
import jax.numpy as jnp
import numpy as np
from jax.experimental import pallas as pl
from jax.experimental.pallas import tpu as pltpu

_LANES = 128


def _cdiv(a, b):
    return -(-a // b)


def _cst_kernel(w_ref, x_ref, o_ref, *, cin, cout):
    # w_ref: (Cin, Cout) f32 weights in SMEM (scalar reads).
    # x_ref: (Cin, tr, 128) f32 pixel block in VMEM (lane-dense).
    # o_ref: (Cout, tr, 128) f32 output block in VMEM.
    x = x_ref[...]
    for o in range(cout):
        acc = x[0] * w_ref[0, o]
        for c in range(1, cin):
            acc = acc + x[c] * w_ref[c, o]
        o_ref[o] = jnp.clip(acc, -1.0, 1.0)


def color_space_transformation(x, kernel, bias=None, *, block_rows=512):
    """Forward pass of ColorSpaceTransformation.

    x: (N, Cin, H, W) float32, kernel: (Cin, Cout) float32.
    bias is accepted only for parameter parity with the PyTorch module — the
    reference forward never uses it.
    Returns (N, Cout, W, H), exactly as the reference op sequence does.
    """
    del bias  # NOTE: unused in the reference forward.
    n, cin, h, w = x.shape
    kcin, cout = kernel.shape
    assert kcin == cin, (kcin, cin)
    p = n * w * h  # number of pixels, in the reference's (n, w, h) flat order

    # ---- layout glue (plain JAX): channels on the leading dim, pixels dense
    # on the minor dims. xt[c, n*W*H + w*H + h] == x[n, c, h, w], which is the
    # same ordering as the reference permute(0,3,2,1).reshape(-1, Cin).
    xt = jnp.transpose(x, (1, 0, 3, 2)).reshape(cin, p).astype(jnp.float32)

    rows = _cdiv(p, _LANES)
    if rows <= block_rows:
        tr, rows_pad = rows, rows          # single block, full extent
    else:
        tr = block_rows                    # multiple of 8 (sublane-aligned)
        rows_pad = _cdiv(rows, tr) * tr
    p_pad = rows_pad * _LANES
    if p_pad != p:
        xt = jnp.pad(xt, ((0, 0), (0, p_pad - p)))
    xt = xt.reshape(cin, rows_pad, _LANES)

    kern = functools.partial(_cst_kernel, cin=cin, cout=cout)
    yt = pl.pallas_call(
        kern,
        out_shape=jax.ShapeDtypeStruct((cout, rows_pad, _LANES), jnp.float32),
        grid_spec=pltpu.PrefetchScalarGridSpec(
            num_scalar_prefetch=0,
            grid=(rows_pad // tr,),
            in_specs=[
                # Tiny weight matrix -> SMEM, read as scalars inside the loop.
                pl.BlockSpec(memory_space=pltpu.MemorySpace.SMEM),
                # Lane-dense pixel blocks, double-buffered by the pipeline.
                pl.BlockSpec((cin, tr, _LANES), lambda i: (0, i, 0)),
            ],
            out_specs=pl.BlockSpec((cout, tr, _LANES), lambda i: (0, i, 0)),
        ),
        compiler_params=pltpu.CompilerParams(
            dimension_semantics=("parallel",),
        ),
    )(kernel.astype(jnp.float32), xt)

    # ---- undo the layout glue, reproducing the reference
    # reshape(N, H, W, Cout).permute(0, 3, 2, 1) exactly.
    y = yt.reshape(cout, p_pad)[:, :p]
    out = jnp.transpose(y.reshape(cout, n, h, w), (1, 0, 3, 2))
    return out


def _reference_numpy(x, kernel):
    """Pure-numpy port of ColorSpaceTransformation.forward."""
    n, c, h, w = x.shape
    m = np.transpose(x, (0, 3, 2, 1)).reshape(-1, c).astype(np.float32) @ kernel
    out = np.transpose(m.reshape(n, h, w, kernel.shape[1]), (0, 3, 2, 1))
    return np.clip(out, -1.0, 1.0).astype(np.float32)


if __name__ == "__main__":
    N, Cin, H, W = 2, 4, 16, 16
    Cout = 4

    key = jax.random.PRNGKey(0)
    k_x, k_w = jax.random.split(key)
    # Range a bit beyond [-1, 1] so the output clamp is exercised.
    x = jax.random.uniform(k_x, (N, Cin, H, W), dtype=jnp.float32,
                           minval=-1.2, maxval=1.2)

    # The module's default init (identity block) and a random kernel.
    w_default = jnp.zeros((Cin, Cout), jnp.float32).at[:Cin, :Cin].set(jnp.eye(Cin))
    w_random = jax.random.normal(k_w, (Cin, Cout), dtype=jnp.float32)
    bias = jnp.zeros((Cin,), jnp.float32)  # present in the module, unused in forward

    for wmat in (w_default, w_random):
        y = color_space_transformation(x, wmat, bias)
        y = jax.block_until_ready(y)
        y_ref = _reference_numpy(np.asarray(x), np.asarray(wmat))
        np.testing.assert_allclose(np.asarray(y), y_ref, rtol=1e-5, atol=1e-5)

    print("KERNEL_OK")
</pallas_src>

<mosaic_0001>
module attributes {stable_mosaic.version = 11 : i64} {
  func.func @_cst_kernel(%arg0: i32, %arg1: memref<4x4xf32, #tpu.memory_space<smem>>, %arg2: memref<4x4x128xf32, #tpu.memory_space<vmem>>, %arg3: memref<4x4x128xf32, #tpu.memory_space<vmem>>) attributes {dimension_semantics = [#tpu.dimension_semantics<parallel>], iteration_bounds = array<i64: 1>, scalar_prefetch = 0 : i64, scratch_operands = 0 : i64, tpu.core_type = #tpu.core_type<tc>, window_params = [{transform_indices = @transform_0, window_bounds = array<i64: 4, 4>}, {transform_indices = @transform_1, window_bounds = array<i64: 4, 4, 128>}, {transform_indices = @transform_2, window_bounds = array<i64: 4, 4, 128>}]} {
    %c0 = arith.constant 0 : index
    %c0_0 = arith.constant 0 : index
    %c0_1 = arith.constant 0 : index
    %0 = vector.load %arg2[%c0, %c0_0, %c0_1] : memref<4x4x128xf32, #tpu.memory_space<vmem>>, vector<4x4x128xf32>
    %1 = vector.extract_strided_slice %0 {offsets = [0, 0, 0], sizes = [1, 4, 128], strides = [1, 1, 1]} : vector<4x4x128xf32> to vector<1x4x128xf32>
    %2 = vector.shape_cast %1 : vector<1x4x128xf32> to vector<4x128xf32>
    %c0_2 = arith.constant 0 : index
    %c0_3 = arith.constant 0 : index
    %3 = memref.load %arg1[%c0_2, %c0_3] : memref<4x4xf32, #tpu.memory_space<smem>>
    %4 = vector.broadcast %3 : f32 to vector<4x128xf32>
    %5 = arith.mulf %2, %4 : vector<4x128xf32>
    %6 = vector.extract_strided_slice %0 {offsets = [1, 0, 0], sizes = [1, 4, 128], strides = [1, 1, 1]} : vector<4x4x128xf32> to vector<1x4x128xf32>
    %7 = vector.shape_cast %6 : vector<1x4x128xf32> to vector<4x128xf32>
    %c1 = arith.constant 1 : index
    %c0_4 = arith.constant 0 : index
    %8 = memref.load %arg1[%c1, %c0_4] : memref<4x4xf32, #tpu.memory_space<smem>>
    %9 = vector.broadcast %8 : f32 to vector<4x128xf32>
    %10 = arith.mulf %7, %9 : vector<4x128xf32>
    %11 = arith.addf %5, %10 : vector<4x128xf32>
    %12 = vector.extract_strided_slice %0 {offsets = [2, 0, 0], sizes = [1, 4, 128], strides = [1, 1, 1]} : vector<4x4x128xf32> to vector<1x4x128xf32>
    %13 = vector.shape_cast %12 : vector<1x4x128xf32> to vector<4x128xf32>
    %c2 = arith.constant 2 : index
    %c0_5 = arith.constant 0 : index
    %14 = memref.load %arg1[%c2, %c0_5] : memref<4x4xf32, #tpu.memory_space<smem>>
    %15 = vector.broadcast %14 : f32 to vector<4x128xf32>
    %16 = arith.mulf %13, %15 : vector<4x128xf32>
    %17 = arith.addf %11, %16 : vector<4x128xf32>
    %18 = vector.extract_strided_slice %0 {offsets = [3, 0, 0], sizes = [1, 4, 128], strides = [1, 1, 1]} : vector<4x4x128xf32> to vector<1x4x128xf32>
    %19 = vector.shape_cast %18 : vector<1x4x128xf32> to vector<4x128xf32>
    %c3 = arith.constant 3 : index
    %c0_6 = arith.constant 0 : index
    %20 = memref.load %arg1[%c3, %c0_6] : memref<4x4xf32, #tpu.memory_space<smem>>
    %21 = vector.broadcast %20 : f32 to vector<4x128xf32>
    %22 = arith.mulf %19, %21 : vector<4x128xf32>
    %23 = arith.addf %17, %22 : vector<4x128xf32>
    %cst = arith.constant -1.000000e+00 : f32
    %cst_7 = arith.constant 1.000000e+00 : f32
    %24 = vector.broadcast %cst : f32 to vector<4x128xf32>
    %25 = arith.maximumf %24, %23 : vector<4x128xf32>
    %26 = vector.broadcast %cst_7 : f32 to vector<4x128xf32>
    %27 = arith.minimumf %26, %25 : vector<4x128xf32>
    %c0_8 = arith.constant 0 : index
    %c0_9 = arith.constant 0 : index
    %c0_10 = arith.constant 0 : index
    %28 = vector.load %arg3[%c0_8, %c0_9, %c0_10] : memref<4x4x128xf32, #tpu.memory_space<vmem>>, vector<1x4x128xf32>
    %29 = vector.shape_cast %28 : vector<1x4x128xf32> to vector<4x128xf32>
    %30 = vector.shape_cast %27 : vector<4x128xf32> to vector<1x4x128xf32>
    tpu.vector_store %arg3[%c0_8, %c0_9, %c0_10], %30 {strides = array<i32>} : memref<4x4x128xf32, #tpu.memory_space<vmem>>, vector<1x4x128xf32>,
    %31 = vector.extract_strided_slice %0 {offsets = [0, 0, 0], sizes = [1, 4, 128], strides = [1, 1, 1]} : vector<4x4x128xf32> to vector<1x4x128xf32>
    %32 = vector.shape_cast %31 : vector<1x4x128xf32> to vector<4x128xf32>
    %c0_11 = arith.constant 0 : index
    %c1_12 = arith.constant 1 : index
    %33 = memref.load %arg1[%c0_11, %c1_12] : memref<4x4xf32, #tpu.memory_space<smem>>
    %34 = vector.broadcast %33 : f32 to vector<4x128xf32>
    %35 = arith.mulf %32, %34 : vector<4x128xf32>
    %36 = vector.extract_strided_slice %0 {offsets = [1, 0, 0], sizes = [1, 4, 128], strides = [1, 1, 1]} : vector<4x4x128xf32> to vector<1x4x128xf32>
    %37 = vector.shape_cast %36 : vector<1x4x128xf32> to vector<4x128xf32>
    %c1_13 = arith.constant 1 : index
    %c1_14 = arith.constant 1 : index
    %38 = memref.load %arg1[%c1_13, %c1_14] : memref<4x4xf32, #tpu.memory_space<smem>>
    %39 = vector.broadcast %38 : f32 to vector<4x128xf32>
    %40 = arith.mulf %37, %39 : vector<4x128xf32>
    %41 = arith.addf %35, %40 : vector<4x128xf32>
    %42 = vector.extract_strided_slice %0 {offsets = [2, 0, 0], sizes = [1, 4, 128], strides = [1, 1, 1]} : vector<4x4x128xf32> to vector<1x4x128xf32>
    %43 = vector.shape_cast %42 : vector<1x4x128xf32> to vector<4x128xf32>
    %c2_15 = arith.constant 2 : index
    %c1_16 = arith.constant 1 : index
    %44 = memref.load %arg1[%c2_15, %c1_16] : memref<4x4xf32, #tpu.memory_space<smem>>
    %45 = vector.broadcast %44 : f32 to vector<4x128xf32>
    %46 = arith.mulf %43, %45 : vector<4x128xf32>
    %47 = arith.addf %41, %46 : vector<4x128xf32>
    %48 = vector.extract_strided_slice %0 {offsets = [3, 0, 0], sizes = [1, 4, 128], strides = [1, 1, 1]} : vector<4x4x128xf32> to vector<1x4x128xf32>
    %49 = vector.shape_cast %48 : vector<1x4x128xf32> to vector<4x128xf32>
    %c3_17 = arith.constant 3 : index
    %c1_18 = arith.constant 1 : index
    %50 = memref.load %arg1[%c3_17, %c1_18] : memref<4x4xf32, #tpu.memory_space<smem>>
    %51 = vector.broadcast %50 : f32 to vector<4x128xf32>
    %52 = arith.mulf %49, %51 : vector<4x128xf32>
    %53 = arith.addf %47, %52 : vector<4x128xf32>
    %cst_19 = arith.constant -1.000000e+00 : f32
    %cst_20 = arith.constant 1.000000e+00 : f32
    %54 = vector.broadcast %cst_19 : f32 to vector<4x128xf32>
    %55 = arith.maximumf %54, %53 : vector<4x128xf32>
    %56 = vector.broadcast %cst_20 : f32 to vector<4x128xf32>
    %57 = arith.minimumf %56, %55 : vector<4x128xf32>
    %c1_21 = arith.constant 1 : index
    %c0_22 = arith.constant 0 : index
    %c0_23 = arith.constant 0 : index
    %58 = vector.load %arg3[%c1_21, %c0_22, %c0_23] : memref<4x4x128xf32, #tpu.memory_space<vmem>>, vector<1x4x128xf32>
    %59 = vector.shape_cast %58 : vector<1x4x128xf32> to vector<4x128xf32>
    %60 = vector.shape_cast %57 : vector<4x128xf32> to vector<1x4x128xf32>
    tpu.vector_store %arg3[%c1_21, %c0_22, %c0_23], %60 {strides = array<i32>} : memref<4x4x128xf32, #tpu.memory_space<vmem>>, vector<1x4x128xf32>,
    %61 = vector.extract_strided_slice %0 {offsets = [0, 0, 0], sizes = [1, 4, 128], strides = [1, 1, 1]} : vector<4x4x128xf32> to vector<1x4x128xf32>
    %62 = vector.shape_cast %61 : vector<1x4x128xf32> to vector<4x128xf32>
    %c0_24 = arith.constant 0 : index
    %c2_25 = arith.constant 2 : index
    %63 = memref.load %arg1[%c0_24, %c2_25] : memref<4x4xf32, #tpu.memory_space<smem>>
    %64 = vector.broadcast %63 : f32 to vector<4x128xf32>
    %65 = arith.mulf %62, %64 : vector<4x128xf32>
    %66 = vector.extract_strided_slice %0 {offsets = [1, 0, 0], sizes = [1, 4, 128], strides = [1, 1, 1]} : vector<4x4x128xf32> to vector<1x4x128xf32>
    %67 = vector.shape_cast %66 : vector<1x4x128xf32> to vector<4x128xf32>
    %c1_26 = arith.constant 1 : index
    %c2_27 = arith.constant 2 : index
    %68 = memref.load %arg1[%c1_26, %c2_27] : memref<4x4xf32, #tpu.memory_space<smem>>
    %69 = vector.broadcast %68 : f32 to vector<4x128xf32>
    %70 = arith.mulf %67, %69 : vector<4x128xf32>
    %71 = arith.addf %65, %70 : vector<4x128xf32>
    %72 = vector.extract_strided_slice %0 {offsets = [2, 0, 0], sizes = [1, 4, 128], strides = [1, 1, 1]} : vector<4x4x128xf32> to vector<1x4x128xf32>
    %73 = vector.shape_cast %72 : vector<1x4x128xf32> to vector<4x128xf32>
    %c2_28 = arith.constant 2 : index
    %c2_29 = arith.constant 2 : index
    %74 = memref.load %arg1[%c2_28, %c2_29] : memref<4x4xf32, #tpu.memory_space<smem>>
    %75 = vector.broadcast %74 : f32 to vector<4x128xf32>
    %76 = arith.mulf %73, %75 : vector<4x128xf32>
    %77 = arith.addf %71, %76 : vector<4x128xf32>
    %78 = vector.extract_strided_slice %0 {offsets = [3, 0, 0], sizes = [1, 4, 128], strides = [1, 1, 1]} : vector<4x4x128xf32> to vector<1x4x128xf32>
    %79 = vector.shape_cast %78 : vector<1x4x128xf32> to vector<4x128xf32>
    %c3_30 = arith.constant 3 : index
    %c2_31 = arith.constant 2 : index
    %80 = memref.load %arg1[%c3_30, %c2_31] : memref<4x4xf32, #tpu.memory_space<smem>>
    %81 = vector.broadcast %80 : f32 to vector<4x128xf32>
    %82 = arith.mulf %79, %81 : vector<4x128xf32>
    %83 = arith.addf %77, %82 : vector<4x128xf32>
    %cst_32 = arith.constant -1.000000e+00 : f32
    %cst_33 = arith.constant 1.000000e+00 : f32
    %84 = vector.broadcast %cst_32 : f32 to vector<4x128xf32>
    %85 = arith.maximumf %84, %83 : vector<4x128xf32>
    %86 = vector.broadcast %cst_33 : f32 to vector<4x128xf32>
    %87 = arith.minimumf %86, %85 : vector<4x128xf32>
    %c2_34 = arith.constant 2 : index
    %c0_35 = arith.constant 0 : index
    %c0_36 = arith.constant 0 : index
    %88 = vector.load %arg3[%c2_34, %c0_35, %c0_36] : memref<4x4x128xf32, #tpu.memory_space<vmem>>, vector<1x4x128xf32>
    %89 = vector.shape_cast %88 : vector<1x4x128xf32> to vector<4x128xf32>
    %90 = vector.shape_cast %87 : vector<4x128xf32> to vector<1x4x128xf32>
    tpu.vector_store %arg3[%c2_34, %c0_35, %c0_36], %90 {strides = array<i32>} : memref<4x4x128xf32, #tpu.memory_space<vmem>>, vector<1x4x128xf32>,
    %91 = vector.extract_strided_slice %0 {offsets = [0, 0, 0], sizes = [1, 4, 128], strides = [1, 1, 1]} : vector<4x4x128xf32> to vector<1x4x128xf32>
    %92 = vector.shape_cast %91 : vector<1x4x128xf32> to vector<4x128xf32>
    %c0_37 = arith.constant 0 : index
    %c3_38 = arith.constant 3 : index
    %93 = memref.load %arg1[%c0_37, %c3_38] : memref<4x4xf32, #tpu.memory_space<smem>>
    %94 = vector.broadcast %93 : f32 to vector<4x128xf32>
    %95 = arith.mulf %92, %94 : vector<4x128xf32>
    %96 = vector.extract_strided_slice %0 {offsets = [1, 0, 0], sizes = [1, 4, 128], strides = [1, 1, 1]} : vector<4x4x128xf32> to vector<1x4x128xf32>
    %97 = vector.shape_cast %96 : vector<1x4x128xf32> to vector<4x128xf32>
    %c1_39 = arith.constant 1 : index
    %c3_40 = arith.constant 3 : index
    %98 = memref.load %arg1[%c1_39, %c3_40] : memref<4x4xf32, #tpu.memory_space<smem>>
    %99 = vector.broadcast %98 : f32 to vector<4x128xf32>
    %100 = arith.mulf %97, %99 : vector<4x128xf32>
    %101 = arith.addf %95, %100 : vector<4x128xf32>
    %102 = vector.extract_strided_slice %0 {offsets = [2, 0, 0], sizes = [1, 4, 128], strides = [1, 1, 1]} : vector<4x4x128xf32> to vector<1x4x128xf32>
    %103 = vector.shape_cast %102 : vector<1x4x128xf32> to vector<4x128xf32>
    %c2_41 = arith.constant 2 : index
    %c3_42 = arith.constant 3 : index
    %104 = memref.load %arg1[%c2_41, %c3_42] : memref<4x4xf32, #tpu.memory_space<smem>>
    %105 = vector.broadcast %104 : f32 to vector<4x128xf32>
    %106 = arith.mulf %103, %105 : vector<4x128xf32>
    %107 = arith.addf %101, %106 : vector<4x128xf32>
    %108 = vector.extract_strided_slice %0 {offsets = [3, 0, 0], sizes = [1, 4, 128], strides = [1, 1, 1]} : vector<4x4x128xf32> to vector<1x4x128xf32>
    %109 = vector.shape_cast %108 : vector<1x4x128xf32> to vector<4x128xf32>
    %c3_43 = arith.constant 3 : index
    %c3_44 = arith.constant 3 : index
    %110 = memref.load %arg1[%c3_43, %c3_44] : memref<4x4xf32, #tpu.memory_space<smem>>
    %111 = vector.broadcast %110 : f32 to vector<4x128xf32>
    %112 = arith.mulf %109, %111 : vector<4x128xf32>
    %113 = arith.addf %107, %112 : vector<4x128xf32>
    %cst_45 = arith.constant -1.000000e+00 : f32
    %cst_46 = arith.constant 1.000000e+00 : f32
    %114 = vector.broadcast %cst_45 : f32 to vector<4x128xf32>
    %115 = arith.maximumf %114, %113 : vector<4x128xf32>
    %116 = vector.broadcast %cst_46 : f32 to vector<4x128xf32>
    %117 = arith.minimumf %116, %115 : vector<4x128xf32>
    %c3_47 = arith.constant 3 : index
    %c0_48 = arith.constant 0 : index
    %c0_49 = arith.constant 0 : index
    %118 = vector.load %arg3[%c3_47, %c0_48, %c0_49] : memref<4x4x128xf32, #tpu.memory_space<vmem>>, vector<1x4x128xf32>
    %119 = vector.shape_cast %118 : vector<1x4x128xf32> to vector<4x128xf32>
    %120 = vector.shape_cast %117 : vector<4x128xf32> to vector<1x4x128xf32>
    tpu.vector_store %arg3[%c3_47, %c0_48, %c0_49], %120 {strides = array<i32>} : memref<4x4x128xf32, #tpu.memory_space<vmem>>, vector<1x4x128xf32>,
    return
  }
  func.func @transform_0(%arg0: i32) -> (i32, i32) {
    %c0_i32 = arith.constant 0 : i32
    %c0_i32_0 = arith.constant 0 : i32
    %c0_i32_1 = arith.constant 0 : i32
    return %c0_i32, %c0_i32_0 : i32, i32
  }
  func.func @transform_1(%arg0: i32) -> (i32, i32, i32) {
    %c0_i32 = arith.constant 0 : i32
    %c0_i32_0 = arith.constant 0 : i32
    %c0_i32_1 = arith.constant 0 : i32
    return %c0_i32, %arg0, %c0_i32_0 : i32, i32, i32
  }
  func.func @transform_2(%arg0: i32) -> (i32, i32, i32) {
    %c0_i32 = arith.constant 0 : i32
    %c0_i32_0 = arith.constant 0 : i32
    %c0_i32_1 = arith.constant 0 : i32
    return %c0_i32, %arg0, %c0_i32_0 : i32, i32, i32
  }
}

</mosaic_0001>

<llo_original>
// kernel: tpu_custom_call.1
$region0: #{tpu_custom_call.1}
  #allocation0 [shape = 'u32[]', space=smem, size = 0x4, offset = 0x4, fixed_abs, tag = 'smem constant byte address 0x4 - core index']
  #allocation1 [shape = 'u32[144,128]{1,0:T(1,128)}', space=vmem, size = 0x12000, scoped, tag = 'internal scratch']
  %s0 = inlined_call_operand.hbm [shape: f32[4,4], index: 0, kind: input, shape index: {}]
  %s1 = inlined_call_operand.hbm [shape: f32[4,4,128], index: 1, kind: input, shape index: {}]
  %s2 = inlined_call_operand.hbm [shape: f32[4,4,128], index: 2, kind: output, shape index: {}]
  %s3 = sld [smem:[#allocation0]]
  $region26: #{tpu_custom_call.1} parent=0
    _
  %s5 = ssub.s32 1, %s3
  %s6 = scalar_select 0, %s5, %s3
  $region1: #{tpu_custom_call.1} parent=0
    #allocation2 [shape = 'u8[2048]{0}', space=smem, size = 0x800, scoped, tag = 'input window, operand 0, single buffered']
    #allocation3 [shape = 's32[1]{0}', space=sflag, size = 0x4, scoped, tag = 'scoped memory for tpu_custom_call.1']
    #allocation4 [shape = 's32[1]{0}', space=sflag, size = 0x4, scoped, tag = 'scoped memory for tpu_custom_call.1']
    #allocation5 [shape = 's32[1]{0}', space=sflag, size = 0x4, scoped, tag = 'scoped memory for tpu_custom_call.1']
    #allocation6 [shape = 'u8[8192]{0}', space=vmem, size = 0x2000, scoped, tag = 'input window, operand 1, single buffered']
    #allocation7 [shape = 'u8[8192]{0}', space=vmem, size = 0x2000, scoped, tag = 'output window, operand 0, single buffered']
    %7 = vsyncpa [#allocation5], 0
    %8 = vsyncpa [#allocation3], 0
    %9 = vsyncpa [#allocation4], 0
    // Predicated region
    $region2: #{tpu_custom_call.1} parent=1 // pred_check
      _
    $region3: #{tpu_custom_call.1} parent=1 // pred_check_branch
      %11 = sbr.rel (0) target = $region5
    $region4: #{tpu_custom_call.1} parent=1 // pred_region
      %s13 = ssub.s32 64, 64
      %14 = vsyncadd [#allocation5], %s13
      %17 = dma.hbm_to_smem %s0, 64, [#allocation2], [#allocation5]
    $region5: #{tpu_custom_call.1} parent=1 // pred_fallthru
      _
    // Predicated region
    $region6: #{tpu_custom_call.1} parent=1 // pred_check
      _
    $region7: #{tpu_custom_call.1} parent=1 // pred_check_branch
      %19 = sbr.rel (0) target = $region9
    $region8: #{tpu_custom_call.1} parent=1 // pred_region
      %s21 = ssub.s32 256, 256
      %22 = vsyncadd [#allocation3], %s21
      %s23 = sshll.u32 [#allocation6], 4
      %s24 = int_to_ptr.vmem [resolvable:$true] %s23
      %29 = dma.hbm_to_vmem [thread:$0]  %s1, 256, %s24, [#allocation3], 64, 64, 4
    $region9: #{tpu_custom_call.1} parent=1 // pred_fallthru
      _
    // Predicated region
    $region10: #{tpu_custom_call.1} parent=1 // pred_check
      _
    $region11: #{tpu_custom_call.1} parent=1 // pred_check_branch
      %31 = sbr.rel (0) target = $region13
    $region12: #{tpu_custom_call.1} parent=1 // pred_region
      %32 = dma.done [#allocation5], 64
    $region13: #{tpu_custom_call.1} parent=1 // pred_fallthru
      _
    // Predicated region
    $region14: #{tpu_custom_call.1} parent=1 // pred_check
      _
    $region15: #{tpu_custom_call.1} parent=1 // pred_check_branch
      %34 = sbr.rel (0) target = $region17
    $region16: #{tpu_custom_call.1} parent=1 // pred_region
      %35 = dma.done [#allocation3], 256
    $region17: #{tpu_custom_call.1} parent=1 // pred_fallthru
      _
    %36 = sfence
    %v37 = vld [vmem:[#allocation6] sm:$0xf]
    %v38 = vld [vmem:[#allocation6 + $0x4] sm:$0xf]
    %v39 = vld [vmem:[#allocation6 + $0x8] sm:$0xf]
    %v40 = vld [vmem:[#allocation6 + $0xc] sm:$0xf]
    %s41 = sld [smem:[#allocation2]]
    %v42 = vstv %s41
    %v43 = vmul.f32 %v37, %v42
    %s44 = sld [smem:[#allocation2 + $0x80]]
    %v45 = vstv %s44
    %v46 = vmul.f32 %v38, %v45
    %v47 = vadd.f32 %v43, %v46
    %s48 = sld [smem:[#allocation2 + $0x100]]
    %v49 = vstv %s48
    %v50 = vmul.f32 %v39, %v49
    %v51 = vadd.f32 %v47, %v50
    %s52 = sld [smem:[#allocation2 + $0x180]]
    %v53 = vstv %s52
    %v54 = vmul.f32 %v40, %v53
    %v55 = vadd.f32 %v51, %v54
    %v56 = vmax.f32 %v55, -1.0
    %v57 = vmin.f32 %v56, 1.0
    %58 = vst [vmem:[#allocation7] sm:$0xf] %v57
    %s59 = sld [smem:[#allocation2 + $0x1]]
    %v60 = vstv %s59
    %v61 = vmul.f32 %v37, %v60
    %s62 = sld [smem:[#allocation2 + $0x81]]
    %v63 = vstv %s62
    %v64 = vmul.f32 %v38, %v63
    %v65 = vadd.f32 %v61, %v64
    %s66 = sld [smem:[#allocation2 + $0x101]]
    %v67 = vstv %s66
    %v68 = vmul.f32 %v39, %v67
    %v69 = vadd.f32 %v65, %v68
    %s70 = sld [smem:[#allocation2 + $0x181]]
    %v71 = vstv %s70
    %v72 = vmul.f32 %v40, %v71
    %v73 = vadd.f32 %v69, %v72
    %v74 = vmax.f32 %v73, -1.0
    %v75 = vmin.f32 %v74, 1.0
    %s76 = scalar_lea.vmem [#allocation7], 4
    %77 = vst [vmem:[%s76] sm:$0xf] %v75
    %s78 = sld [smem:[#allocation2 + $0x2]]
    %v79 = vstv %s78
    %v80 = vmul.f32 %v37, %v79
    %s81 = sld [smem:[#allocation2 + $0x82]]
    %v82 = vstv %s81
    %v83 = vmul.f32 %v38, %v82
    %v84 = vadd.f32 %v80, %v83
    %s85 = sld [smem:[#allocation2 + $0x102]]
    %v86 = vstv %s85
    %v87 = vmul.f32 %v39, %v86
    %v88 = vadd.f32 %v84, %v87
    %s89 = sld [smem:[#allocation2 + $0x182]]
    %v90 = vstv %s89
    %v91 = vmul.f32 %v40, %v90
    %v92 = vadd.f32 %v88, %v91
    %v93 = vmax.f32 %v92, -1.0
    %v94 = vmin.f32 %v93, 1.0
    %s95 = scalar_lea.vmem [#allocation7], 8
    %96 = vst [vmem:[%s95] sm:$0xf] %v94
    %s97 = sld [smem:[#allocation2 + $0x3]]
    %v98 = vstv %s97
    %v99 = vmul.f32 %v37, %v98
    %s100 = sld [smem:[#allocation2 + $0x83]]
    %v101 = vstv %s100
    %v102 = vmul.f32 %v38, %v101
    %v103 = vadd.f32 %v99, %v102
    %s104 = sld [smem:[#allocation2 + $0x103]]
    %v105 = vstv %s104
    %v106 = vmul.f32 %v39, %v105
    %v107 = vadd.f32 %v103, %v106
    %s108 = sld [smem:[#allocation2 + $0x183]]
    %v109 = vstv %s108
    %v110 = vmul.f32 %v40, %v109
    %v111 = vadd.f32 %v107, %v110
    %v112 = vmax.f32 %v111, -1.0
    %v113 = vmin.f32 %v112, 1.0
    %s114 = scalar_lea.vmem [#allocation7], 12
    %115 = vst [vmem:[%s114] sm:$0xf] %v113
    // Predicated region
    $region18: #{tpu_custom_call.1} parent=1 // pred_check
      _
    $region19: #{tpu_custom_call.1} parent=1 // pred_check_branch
      %117 = sbr.rel (0) target = $region21
    $region20: #{tpu_custom_call.1} parent=1 // pred_region
      %s119 = ssub.s32 256, 256
      %120 = vsyncadd [#allocation4], %s119
      %s121 = sshll.u32 [#allocation7], 4
      %s122 = int_to_ptr.vmem [resolvable:$true] %s121
      %127 = dma.vmem_to_hbm [thread:$0]  %s122, 256, %s2, [#allocation4], 64, 64, 4
    $region21: #{tpu_custom_call.1} parent=1 // pred_fallthru
      _
    // Predicated region
    $region22: #{tpu_custom_call.1} parent=1 // pred_check
      _
    $region23: #{tpu_custom_call.1} parent=1 // pred_check_branch
      %129 = sbr.rel (0) target = $region25
    $region24: #{tpu_custom_call.1} parent=1 // pred_region
      %130 = dma.done [#allocation4], 256
    $region25: #{tpu_custom_call.1} parent=1 // pred_fallthru
      _
    %131 = vsyncpa [#allocation3], 1
    %132 = vsyncpa [#allocation4], 1
    %133 = vsyncpa [#allocation5], 1

</llo_original>
